<compile_context>
chip_gen: v7x
topology: tpu7x:2x2x1
jax: 0.10.0
libtpu: 0.0.40
codegen_flags: <defaults>
</compile_context>

<pallas_src>
import jax
import jax.numpy as jnp
from jax.experimental import pallas as pl
from jax.experimental.pallas import tpu as pltpu

LANES = 512  # batch lanes per slab row (multiple of 128)


def mlp_kernel(params_ref, x_ref, o_ref):
    # params_ref: SMEM (17,) f32  layout:
    #   [0:8]   w1[k, j] at k*4 + j   (k in {0,1}, j in {0..3})
    #   [8:12]  b1[j]
    #   [12:16] w2[j, 0]
    #   [16]    b2
    # x_ref: VMEM (2, TR, LANES) f32 (feature-major slab, batch on rows x lanes)
    # o_ref: VMEM (TR, LANES) f32
    x0 = x_ref[0]                             # (TR, LANES)
    x1 = x_ref[1]                             # (TR, LANES)

    y = jnp.zeros_like(x0) + params_ref[16]   # start from b2, broadcast over tile
    for j in range(4):                        # unrolled: 4 hidden units, pure VPU MACs
        h = x0 * params_ref[j] + x1 * params_ref[4 + j] + params_ref[8 + j]
        h = jnp.maximum(h, 0.0)               # ReLU
        y = y + h * params_ref[12 + j]

    # Sigmoid: exp on EUP, reciprocal also on EUP (approx) -> VALU stays empty.
    o_ref[...] = pl.reciprocal(1.0 + jnp.exp(-y), approx=True)


def simple_nn_forward(x, w1, b1, w2, b2, *, tile_rows=2048, lanes=LANES):
    """x: (B, 2) f32; w1: (2, 4); b1: (1, 4); w2: (4, 1); b2: (1, 1). Returns (B, 1)."""
    B = x.shape[0]

    # Pack all 17 parameters into one SMEM-resident scalar array.
    params = jnp.concatenate(
        [w1.reshape(-1), b1.reshape(-1), w2.reshape(-1), b2.reshape(-1)]
    ).astype(jnp.float32)

    # Dense slab geometry: batch laid out as (rows, lanes), lanes % 128 == 0.
    rows = max(1, -(-B // lanes))              # ceil(B / lanes)
    tile_rows = max(8, (tile_rows // 8) * 8)   # row tile must be a multiple of 8
    if rows <= tile_rows:
        tr = rows                              # single tile covering full row dim
        rows_p = rows
    else:
        tr = tile_rows
        rows_p = -(-rows // tr) * tr           # pad rows to a multiple of tr
    Bp = rows_p * lanes
    num_tiles = rows_p // tr

    # Feature-major slab (2, rows_p, lanes). The reshape is a free row-major
    # view; the transpose+pad is one fused HLO copy.
    # TODO(synk): accept x feature-major (2, B) upstream to remove this copy.
    xt = jnp.pad(x.astype(jnp.float32).T, ((0, 0), (0, Bp - B)))
    xt = xt.reshape(2, rows_p, lanes)

    out = pl.pallas_call(
        mlp_kernel,
        out_shape=jax.ShapeDtypeStruct((rows_p, lanes), jnp.float32),
        grid_spec=pltpu.PrefetchScalarGridSpec(
            num_scalar_prefetch=1,
            grid=(num_tiles,),
            in_specs=[pl.BlockSpec((2, tr, lanes), lambda i, p: (0, i, 0))],
            out_specs=pl.BlockSpec((tr, lanes), lambda i, p: (i, 0)),
        ),
        compiler_params=pltpu.CompilerParams(
            dimension_semantics=("parallel",),
            # Double-buffered in+out for a tr*lanes tile is ~24 bytes/elem
            # (~24 MiB at the 1M-elem default). 48 MiB backs that on all of
            # v5e/v6e and stays under v7x's 64 MiB physical VMEM.
            vmem_limit_bytes=48 * 1024 * 1024,
        ),
        cost_estimate=pl.CostEstimate(
            flops=30 * Bp, transcendentals=2 * Bp, bytes_accessed=12 * Bp + 68
        ),
    )(params, xt)

    return out.reshape(-1)[:B].reshape(B, 1)


def init_params(key):
    """Deterministic init mimicking PyTorch nn.Linear default (uniform +-1/sqrt(fan_in))."""
    k1, k2, k3, k4 = jax.random.split(key, 4)
    bound1 = 1.0 / jnp.sqrt(2.0)
    bound2 = 1.0 / jnp.sqrt(4.0)
    # Stored already transposed to (in, out) layout for the kernel math.
    w1 = jax.random.uniform(k1, (2, 4), jnp.float32, -bound1, bound1)
    b1 = jax.random.uniform(k2, (1, 4), jnp.float32, -bound1, bound1)
    w2 = jax.random.uniform(k3, (4, 1), jnp.float32, -bound2, bound2)
    b2 = jax.random.uniform(k4, (1, 1), jnp.float32, -bound2, bound2)
    return w1, b1, w2, b2


if __name__ == "__main__":
    key = jax.random.PRNGKey(0)
    pkey, xkey = jax.random.split(key)
    w1, b1, w2, b2 = init_params(pkey)

    B = 8
    x = jax.random.normal(xkey, (B, 2), jnp.float32)

    out = simple_nn_forward(x, w1, b1, w2, b2)
    out = jax.block_until_ready(out)

    # Pure-JAX reference check of the forward semantics.
    ref = 1.0 / (1.0 + jnp.exp(-(jnp.maximum(x @ w1 + b1, 0.0) @ w2 + b2)))
    assert out.shape == (B, 1)
    # approx=True reciprocal (EUP) has ~2^-12 relative error; tolerance reflects that.
    assert jnp.allclose(out, ref, atol=1e-3, rtol=1e-3)

    print("KERNEL_OK")
</pallas_src>

<mosaic_0001>
module attributes {stable_mosaic.version = 11 : i64} {
  func.func @mlp_kernel(%arg0: i32, %arg1: memref<17xf32, #tpu.memory_space<smem>>, %arg2: memref<2x1x512xf32, #tpu.memory_space<vmem>>, %arg3: memref<1x512xf32, #tpu.memory_space<vmem>>) attributes {dimension_semantics = [#tpu.dimension_semantics<parallel>], iteration_bounds = array<i64: 1>, scalar_prefetch = 1 : i64, scratch_operands = 0 : i64, tpu.core_type = #tpu.core_type<tc>, window_params = [{transform_indices = @transform_0, window_bounds = array<i64: 2, 1, 512>}, {transform_indices = @transform_1, window_bounds = array<i64: 1, 512>}]} {
    %c0 = arith.constant 0 : index
    %c0_0 = arith.constant 0 : index
    %c0_1 = arith.constant 0 : index
    %0 = vector.load %arg2[%c0, %c0_0, %c0_1] : memref<2x1x512xf32, #tpu.memory_space<vmem>>, vector<1x1x512xf32>
    %1 = vector.shape_cast %0 : vector<1x1x512xf32> to vector<1x512xf32>
    %c1 = arith.constant 1 : index
    %c0_2 = arith.constant 0 : index
    %c0_3 = arith.constant 0 : index
    %2 = vector.load %arg2[%c1, %c0_2, %c0_3] : memref<2x1x512xf32, #tpu.memory_space<vmem>>, vector<1x1x512xf32>
    %3 = vector.shape_cast %2 : vector<1x1x512xf32> to vector<1x512xf32>
    %cst = arith.constant 0.000000e+00 : f32
    %4 = vector.broadcast %cst : f32 to vector<1x512xf32>
    %c16 = arith.constant 16 : index
    %5 = memref.load %arg1[%c16] : memref<17xf32, #tpu.memory_space<smem>>
    %6 = vector.broadcast %5 : f32 to vector<1x512xf32>
    %7 = arith.addf %4, %6 : vector<1x512xf32>
    %c0_4 = arith.constant 0 : index
    %8 = memref.load %arg1[%c0_4] : memref<17xf32, #tpu.memory_space<smem>>
    %9 = vector.broadcast %8 : f32 to vector<1x512xf32>
    %10 = arith.mulf %1, %9 : vector<1x512xf32>
    %c4 = arith.constant 4 : index
    %11 = memref.load %arg1[%c4] : memref<17xf32, #tpu.memory_space<smem>>
    %12 = vector.broadcast %11 : f32 to vector<1x512xf32>
    %13 = arith.mulf %3, %12 : vector<1x512xf32>
    %14 = arith.addf %10, %13 : vector<1x512xf32>
    %c8 = arith.constant 8 : index
    %15 = memref.load %arg1[%c8] : memref<17xf32, #tpu.memory_space<smem>>
    %16 = vector.broadcast %15 : f32 to vector<1x512xf32>
    %17 = arith.addf %14, %16 : vector<1x512xf32>
    %cst_5 = arith.constant 0.000000e+00 : f32
    %18 = vector.broadcast %cst_5 : f32 to vector<1x512xf32>
    %19 = arith.maximumf %17, %18 : vector<1x512xf32>
    %c12 = arith.constant 12 : index
    %20 = memref.load %arg1[%c12] : memref<17xf32, #tpu.memory_space<smem>>
    %21 = vector.broadcast %20 : f32 to vector<1x512xf32>
    %22 = arith.mulf %19, %21 : vector<1x512xf32>
    %23 = arith.addf %7, %22 : vector<1x512xf32>
    %c1_6 = arith.constant 1 : index
    %24 = memref.load %arg1[%c1_6] : memref<17xf32, #tpu.memory_space<smem>>
    %25 = vector.broadcast %24 : f32 to vector<1x512xf32>
    %26 = arith.mulf %1, %25 : vector<1x512xf32>
    %c5 = arith.constant 5 : index
    %27 = memref.load %arg1[%c5] : memref<17xf32, #tpu.memory_space<smem>>
    %28 = vector.broadcast %27 : f32 to vector<1x512xf32>
    %29 = arith.mulf %3, %28 : vector<1x512xf32>
    %30 = arith.addf %26, %29 : vector<1x512xf32>
    %c9 = arith.constant 9 : index
    %31 = memref.load %arg1[%c9] : memref<17xf32, #tpu.memory_space<smem>>
    %32 = vector.broadcast %31 : f32 to vector<1x512xf32>
    %33 = arith.addf %30, %32 : vector<1x512xf32>
    %cst_7 = arith.constant 0.000000e+00 : f32
    %34 = vector.broadcast %cst_7 : f32 to vector<1x512xf32>
    %35 = arith.maximumf %33, %34 : vector<1x512xf32>
    %c13 = arith.constant 13 : index
    %36 = memref.load %arg1[%c13] : memref<17xf32, #tpu.memory_space<smem>>
    %37 = vector.broadcast %36 : f32 to vector<1x512xf32>
    %38 = arith.mulf %35, %37 : vector<1x512xf32>
    %39 = arith.addf %23, %38 : vector<1x512xf32>
    %c2 = arith.constant 2 : index
    %40 = memref.load %arg1[%c2] : memref<17xf32, #tpu.memory_space<smem>>
    %41 = vector.broadcast %40 : f32 to vector<1x512xf32>
    %42 = arith.mulf %1, %41 : vector<1x512xf32>
    %c6 = arith.constant 6 : index
    %43 = memref.load %arg1[%c6] : memref<17xf32, #tpu.memory_space<smem>>
    %44 = vector.broadcast %43 : f32 to vector<1x512xf32>
    %45 = arith.mulf %3, %44 : vector<1x512xf32>
    %46 = arith.addf %42, %45 : vector<1x512xf32>
    %c10 = arith.constant 10 : index
    %47 = memref.load %arg1[%c10] : memref<17xf32, #tpu.memory_space<smem>>
    %48 = vector.broadcast %47 : f32 to vector<1x512xf32>
    %49 = arith.addf %46, %48 : vector<1x512xf32>
    %cst_8 = arith.constant 0.000000e+00 : f32
    %50 = vector.broadcast %cst_8 : f32 to vector<1x512xf32>
    %51 = arith.maximumf %49, %50 : vector<1x512xf32>
    %c14 = arith.constant 14 : index
    %52 = memref.load %arg1[%c14] : memref<17xf32, #tpu.memory_space<smem>>
    %53 = vector.broadcast %52 : f32 to vector<1x512xf32>
    %54 = arith.mulf %51, %53 : vector<1x512xf32>
    %55 = arith.addf %39, %54 : vector<1x512xf32>
    %c3 = arith.constant 3 : index
    %56 = memref.load %arg1[%c3] : memref<17xf32, #tpu.memory_space<smem>>
    %57 = vector.broadcast %56 : f32 to vector<1x512xf32>
    %58 = arith.mulf %1, %57 : vector<1x512xf32>
    %c7 = arith.constant 7 : index
    %59 = memref.load %arg1[%c7] : memref<17xf32, #tpu.memory_space<smem>>
    %60 = vector.broadcast %59 : f32 to vector<1x512xf32>
    %61 = arith.mulf %3, %60 : vector<1x512xf32>
    %62 = arith.addf %58, %61 : vector<1x512xf32>
    %c11 = arith.constant 11 : index
    %63 = memref.load %arg1[%c11] : memref<17xf32, #tpu.memory_space<smem>>
    %64 = vector.broadcast %63 : f32 to vector<1x512xf32>
    %65 = arith.addf %62, %64 : vector<1x512xf32>
    %cst_9 = arith.constant 0.000000e+00 : f32
    %66 = vector.broadcast %cst_9 : f32 to vector<1x512xf32>
    %67 = arith.maximumf %65, %66 : vector<1x512xf32>
    %c15 = arith.constant 15 : index
    %68 = memref.load %arg1[%c15] : memref<17xf32, #tpu.memory_space<smem>>
    %69 = vector.broadcast %68 : f32 to vector<1x512xf32>
    %70 = arith.mulf %67, %69 : vector<1x512xf32>
    %71 = arith.addf %55, %70 : vector<1x512xf32>
    %cst_10 = arith.constant 0.000000e+00 : f32
    %72 = vector.broadcast %cst_10 : f32 to vector<1x512xf32>
    %73 = arith.subf %72, %71 : vector<1x512xf32>
    %74 = math.exp %73 : vector<1x512xf32>
    %cst_11 = arith.constant 1.000000e+00 : f32
    %75 = vector.broadcast %cst_11 : f32 to vector<1x512xf32>
    %76 = arith.addf %75, %74 : vector<1x512xf32>
    %77 = tpu.reciprocal %76 {approx = true} : vector<1x512xf32> -> vector<1x512xf32>
    %c0_12 = arith.constant 0 : index
    %c0_13 = arith.constant 0 : index
    %78 = vector.load %arg3[%c0_12, %c0_13] : memref<1x512xf32, #tpu.memory_space<vmem>>, vector<1x512xf32>
    tpu.vector_store %arg3[%c0_12, %c0_13], %77 {strides = array<i32>} : memref<1x512xf32, #tpu.memory_space<vmem>>, vector<1x512xf32>,
    return
  }
  func.func @transform_0(%arg0: i32, %arg1: memref<17xf32, #tpu.memory_space<smem>>) -> (i32, i32, i32) {
    %c0_i32 = arith.constant 0 : i32
    %c0_i32_0 = arith.constant 0 : i32
    %c0_i32_1 = arith.constant 0 : i32
    return %c0_i32, %arg0, %c0_i32_0 : i32, i32, i32
  }
  func.func @transform_1(%arg0: i32, %arg1: memref<17xf32, #tpu.memory_space<smem>>) -> (i32, i32) {
    %c0_i32 = arith.constant 0 : i32
    %c0_i32_0 = arith.constant 0 : i32
    return %arg0, %c0_i32 : i32, i32
  }
}

</mosaic_0001>

<llo_original>
// kernel: tpu_custom_call.1
$region0: #{tpu_custom_call.1}
  #allocation0 [shape = 'u32[]', space=smem, size = 0x4, offset = 0x4, fixed_abs, tag = 'smem constant byte address 0x4 - core index']
  #allocation1 [shape = 'u32[144,128]{1,0:T(1,128)}', space=vmem, size = 0x12000, scoped, tag = 'internal scratch']
  #allocation2 [shape = 's32[1]{0}', space=sflag, size = 0x4, scoped, tag = 'scoped memory for tpu_custom_call.1']
  #allocation3 [shape = 'u8[512]{0}', space=smem, size = 0x200, scoped, tag = 'prefetched SMEM operand 0']
  %s0 = inlined_call_operand.hbm [shape: f32[17], index: 0, kind: input, shape index: {}]
  %s1 = inlined_call_operand.hbm [shape: f32[2,1,512], index: 1, kind: input, shape index: {}]
  %s2 = inlined_call_operand.hbm [shape: f32[1,512], index: 2, kind: output, shape index: {}]
  %s3 = sld [smem:[#allocation0]]
  $region18: #{tpu_custom_call.1} parent=0
    _
  %s5 = ssub.s32 1, %s3
  %s6 = scalar_select 0, %s5, %s3
  %8 = dma.hbm_to_smem %s0, 16, [#allocation3], [#allocation2]
  %9 = dma.done [#allocation2], 16
  %10 = sfence
  $region1: #{tpu_custom_call.1} parent=0
    #allocation4 [shape = 'u8[4096]{0}', space=vmem, size = 0x1000, scoped, tag = 'input window, operand 1, single buffered']
    #allocation5 [shape = 's32[1]{0}', space=sflag, size = 0x4, scoped, tag = 'scoped memory for tpu_custom_call.1']
    #allocation6 [shape = 's32[1]{0}', space=sflag, size = 0x4, scoped, tag = 'scoped memory for tpu_custom_call.1']
    #allocation7 [shape = 'u8[2048]{0}', space=vmem, size = 0x800, scoped, tag = 'output window, operand 0, single buffered']
    %11 = vsyncpa [#allocation5], 0
    %12 = vsyncpa [#allocation6], 0
    // Predicated region
    $region2: #{tpu_custom_call.1} parent=1 // pred_check
      _
    $region3: #{tpu_custom_call.1} parent=1 // pred_check_branch
      %14 = sbr.rel (0) target = $region5
    $region4: #{tpu_custom_call.1} parent=1 // pred_region
      %s16 = ssub.s32 128, 128
      %17 = vsyncadd [#allocation5], %s16
      %s18 = sshll.u32 [#allocation4], 4
      %s19 = int_to_ptr.vmem [resolvable:$true] %s18
      %24 = dma.hbm_to_vmem [thread:$0]  %s1, 128, %s19, [#allocation5], 64, 64, 4
    $region5: #{tpu_custom_call.1} parent=1 // pred_fallthru
      _
    // Predicated region
    $region6: #{tpu_custom_call.1} parent=1 // pred_check
      _
    $region7: #{tpu_custom_call.1} parent=1 // pred_check_branch
      %26 = sbr.rel (0) target = $region9
    $region8: #{tpu_custom_call.1} parent=1 // pred_region
      %27 = dma.done [#allocation5], 128
    $region9: #{tpu_custom_call.1} parent=1 // pred_fallthru
      _
    %v28 = vld [vmem:[#allocation4] sm:$0xf]
    %s29 = scalar_lea.vmem [#allocation4], 4
    %v30 = vld [vmem:[%s29] sm:$0xf]
    %s31 = sld [smem:[#allocation3 + $0x10]]
    %v32 = vstv %s31
    %v33 = vadd.f32 %v32, 0.0
    %s34 = sld [smem:[#allocation3]]
    %v35 = vstv %s34
    %v36 = vmul.f32 %v28, %v35
    %s37 = sld [smem:[#allocation3 + $0x4]]
    %v38 = vstv %s37
    %v39 = vmul.f32 %v30, %v38
    %v40 = vadd.f32 %v36, %v39
    %s41 = sld [smem:[#allocation3 + $0x8]]
    %v42 = vstv %s41
    %v43 = vadd.f32 %v40, %v42
    %v44 = vmax.f32 %v43, 0.0
    %s45 = sld [smem:[#allocation3 + $0xc]]
    %v46 = vstv %s45
    %v47 = vmul.f32 %v44, %v46
    %v48 = vadd.f32 %v33, %v47
    %s49 = sld [smem:[#allocation3 + $0x1]]
    %v50 = vstv %s49
    %v51 = vmul.f32 %v28, %v50
    %s52 = sld [smem:[#allocation3 + $0x5]]
    %v53 = vstv %s52
    %v54 = vmul.f32 %v30, %v53
    %v55 = vadd.f32 %v51, %v54
    %s56 = sld [smem:[#allocation3 + $0x9]]
    %v57 = vstv %s56
    %v58 = vadd.f32 %v55, %v57
    %v59 = vmax.f32 %v58, 0.0
    %s60 = sld [smem:[#allocation3 + $0xd]]
    %v61 = vstv %s60
    %v62 = vmul.f32 %v59, %v61
    %v63 = vadd.f32 %v48, %v62
    %s64 = sld [smem:[#allocation3 + $0x2]]
    %v65 = vstv %s64
    %v66 = vmul.f32 %v28, %v65
    %s67 = sld [smem:[#allocation3 + $0x6]]
    %v68 = vstv %s67
    %v69 = vmul.f32 %v30, %v68
    %v70 = vadd.f32 %v66, %v69
    %s71 = sld [smem:[#allocation3 + $0xa]]
    %v72 = vstv %s71
    %v73 = vadd.f32 %v70, %v72
    %v74 = vmax.f32 %v73, 0.0
    %s75 = sld [smem:[#allocation3 + $0xe]]
    %v76 = vstv %s75
    %v77 = vmul.f32 %v74, %v76
    %v78 = vadd.f32 %v63, %v77
    %s79 = sld [smem:[#allocation3 + $0x3]]
    %v80 = vstv %s79
    %v81 = vmul.f32 %v28, %v80
    %s82 = sld [smem:[#allocation3 + $0x7]]
    %v83 = vstv %s82
    %v84 = vmul.f32 %v30, %v83
    %v85 = vadd.f32 %v81, %v84
    %s86 = sld [smem:[#allocation3 + $0xb]]
    %v87 = vstv %s86
    %v88 = vadd.f32 %v85, %v87
    %v89 = vmax.f32 %v88, 0.0
    %s90 = sld [smem:[#allocation3 + $0xf]]
    %v91 = vstv %s90
    %v92 = vmul.f32 %v89, %v91
    %v93 = vadd.f32 %v78, %v92
    %v94 = vsub.f32 0.0, %v93
    %v95 = vmul.f32 %v94, 1.442695
    %v96 = vpow.pop %v95
    %v97 = vadd.f32 %v96, 1.0
    %v98 = vrcp.pop %v97
    %v99 = vlaneseq
    %vm100 = vcmp.ge.s32.totalorder %v99, 0
    %vm101 = vcmp.lt.s32.totalorder %v99, 512
    %vm102 = vmand %vm100, %vm101
    %103 = vst.msk [vmem:[#allocation7] sm:$0xf] %vm102, %v98
    // Predicated region
    $region10: #{tpu_custom_call.1} parent=1 // pred_check
      _
    $region11: #{tpu_custom_call.1} parent=1 // pred_check_branch
      %105 = sbr.rel (0) target = $region13
    $region12: #{tpu_custom_call.1} parent=1 // pred_region
      %s107 = ssub.s32 64, 64
      %108 = vsyncadd [#allocation6], %s107
      %s110 = sshll.u32 [#allocation7], 4
      %s111 = int_to_ptr.vmem [resolvable:$true] %s110
      %113 = dma.vmem_to_hbm [thread:$0]  %s111, 64, %s2, [#allocation6]
    $region13: #{tpu_custom_call.1} parent=1 // pred_fallthru
      _
    // Predicated region
    $region14: #{tpu_custom_call.1} parent=1 // pred_check
      _
    $region15: #{tpu_custom_call.1} parent=1 // pred_check_branch
      %115 = sbr.rel (0) target = $region17
    $region16: #{tpu_custom_call.1} parent=1 // pred_region
      %116 = dma.done [#allocation6], 64
    $region17: #{tpu_custom_call.1} parent=1 // pred_fallthru
      _
    %117 = vsyncpa [#allocation5], 1
    %118 = vsyncpa [#allocation6], 1

</llo_original>
